<compile_context>
chip_gen: v7x
topology: tpu7x:2x2x1
jax: 0.10.0
libtpu: 0.0.40
codegen_flags: <defaults>
</compile_context>

<pallas_src>
import functools

import jax
import jax.numpy as jnp
from jax import lax
from jax.experimental import pallas as pl
from jax.experimental.pallas import tpu as pltpu


def _round_up(x, m):
    return (x + m - 1) // m * m


def _fused_embed_kernel(ids_ref, wts_ref, tbl_ref, pwe_ref, g_ref, beta_ref,
                        o_ref, *, eps, h_real):
    """One token tile: one-hot gather of pre-projected rows -> +wts*pwe -> LN.

    Per grid step:
      ids:        (TN, 1)   int32  row index into the fused table
      wts:        (TN, 1)   f32    per-token weight (0 for drug tokens)
      tbl:        (Vp, Hp)  bf16   fused [drug_tbl@W_d + b_d ; prot_tbl@W_p + b_p]
      pwe/g/beta: (1,  Hp)  f32    zero-padded past h_real
      o:          (TN, Hp)  out dtype (lane-dense, Hp % 128 == 0)

    NOTE: tail grid blocks read ids/wts past N.  That is safe ONLY because the
    gather is a one-hot matmul (no indirect memory access) and the pad rows
    are dropped on output writeback; keep that invariant if this is ever
    changed into a real gather.
    """
    ids = ids_ref[...]                                      # (TN, 1) int32
    tn = ids.shape[0]
    vocab = tbl_ref.shape[0]
    hpad = tbl_ref.shape[1]

    # Gather + Linear(+bias) in one MXU push: the table rows are already
    # projected, and 0/1 one-hot weights are exact in bf16.
    row_iota = lax.broadcasted_iota(jnp.int32, (tn, vocab), 1)
    onehot = (ids == row_iota).astype(jnp.bfloat16)         # (TN, Vp)
    y = jnp.dot(onehot, tbl_ref[...],
                preferred_element_type=jnp.float32)         # (TN, Hp) f32

    # Weighted protein_weight_embedding add (wts == 0 for drug tokens), f32.
    y = y + wts_ref[...] * pwe_ref[...]

    # LayerNorm over the REAL hidden width.  Padded lanes of y are exactly 0
    # (zero table columns / zero pwe), so full-width sums equal real-lane
    # sums; `mean * lane_mask` keeps padded lanes of `cent` at 0 so the
    # centered variance is exact.
    inv_h = 1.0 / h_real
    lane = lax.broadcasted_iota(jnp.int32, (1, hpad), 1)
    lane_mask = (lane < h_real).astype(jnp.float32)
    mean = jnp.sum(y, axis=-1, keepdims=True) * inv_h
    cent = y - mean * lane_mask
    var = jnp.sum(cent * cent, axis=-1, keepdims=True) * inv_h
    inv = lax.rsqrt(var + eps)                              # EUP slot
    # gamma/beta are zero-padded -> padded output lanes are exactly 0.
    o_ref[...] = (cent * inv * g_ref[...] + beta_ref[...]).astype(o_ref.dtype)


def build_fused_params(params):
    """One-time parameter prep (hoisted out of the per-call forward path)."""
    f32 = jnp.float32
    drug_table = params["drug_table"].astype(f32)
    protein_table = params["protein_table"].astype(f32)
    h = params["drug_W"].shape[1]

    # Fuse Embedding + Linear(+bias) in f32: one (V, H) lookup table.
    drug_rows = drug_table @ params["drug_W"] + params["drug_b"][None, :]
    prot_rows = protein_table @ params["protein_W"] + params["protein_b"][None, :]
    fused = jnp.concatenate([drug_rows, prot_rows], axis=0)       # (V, H) f32

    vocab = fused.shape[0]
    vocab_pad = _round_up(vocab, 8)            # sublane-friendly contraction dim
    hpad = _round_up(h, 128)                   # lane-dense output / MXU columns
    fused = jnp.pad(fused, ((0, vocab_pad - vocab), (0, hpad - h)))

    def pad_vec(v):
        return jnp.pad(v.reshape(1, -1).astype(f32), ((0, 0), (0, hpad - h)))

    return {
        "fused_table": fused.astype(jnp.bfloat16),   # single bf16 rounding
        "pwe": pad_vec(params["pwe"]),
        "ln_gamma": pad_vec(params["ln_gamma"]),
        "ln_beta": pad_vec(params["ln_beta"]),
        "drug_size": int(params["drug_table"].shape[0]),
        "hidden": int(h),
    }


def fused_embed_layernorm(ids, wts, fused_table, pwe, gamma, beta, *,
                          h_real, eps, out_dtype=jnp.float32):
    """ids: (N,) int32 rows of fused_table; wts: (N,) f32. Returns (N, Hpad)."""
    n = ids.shape[0]
    vocab_pad, hpad = fused_table.shape

    # >= 2 grid steps whenever possible so ("parallel",) can shard across the
    # two TensorCores on v7x; cap at 1024 token rows per tile.
    tn = min(1024, max(8, _round_up(-(-n // 2), 8)))
    grid = (pl.cdiv(n, tn),)

    ids2 = ids.reshape(n, 1).astype(jnp.int32)
    wts2 = wts.reshape(n, 1).astype(jnp.float32)

    # VMEM budget: resident table/params + double-buffered ids/wts/out tiles,
    # with headroom; clamp into [32 MiB, 96 MiB].
    out_bytes = jnp.dtype(out_dtype).itemsize
    resident = vocab_pad * hpad * 2 + 3 * hpad * 4
    tiles = tn * (4 + 4 + hpad * out_bytes)
    vmem_limit = int(2 * (resident + tiles)) + (16 << 20)
    vmem_limit = max(32 << 20, min(vmem_limit, 96 << 20))

    kernel = functools.partial(_fused_embed_kernel, eps=eps, h_real=h_real)
    return pl.pallas_call(
        kernel,
        out_shape=jax.ShapeDtypeStruct((n, hpad), out_dtype),
        grid=grid,
        in_specs=[
            pl.BlockSpec((tn, 1), lambda i: (i, 0)),            # ids (pipelined)
            pl.BlockSpec((tn, 1), lambda i: (i, 0)),            # wts (pipelined)
            pl.BlockSpec((vocab_pad, hpad), lambda i: (0, 0)),  # fused table (resident)
            pl.BlockSpec((1, hpad), lambda i: (0, 0)),          # protein_weight_embedding
            pl.BlockSpec((1, hpad), lambda i: (0, 0)),          # LN gamma
            pl.BlockSpec((1, hpad), lambda i: (0, 0)),          # LN beta
        ],
        out_specs=pl.BlockSpec((tn, hpad), lambda i: (i, 0)),   # lane-dense store
        compiler_params=pltpu.CompilerParams(
            dimension_semantics=("parallel",),                  # shards over TCs on v7x
            vmem_limit_bytes=vmem_limit),
    )(ids2, wts2, fused_table, pwe, gamma, beta)


def drug_protein_embedding_forward(fused_params, drug_comb_ids, protein_ids,
                                   weights=None, *, eps=1e-12,
                                   out_dtype=jnp.float32):
    """Replicates DrugProteinEmbeddingLayer.forward (eval mode, dropout=id)."""
    B, Ld = drug_comb_ids.shape
    _, Lp = protein_ids.shape
    h = fused_params["hidden"]
    ds_ = fused_params["drug_size"]
    f32 = jnp.float32

    # Per-token ids / weights laid out in the final (drug ++ protein) sequence
    # order so the kernel writes the concatenated output directly.
    ids = jnp.concatenate([drug_comb_ids.astype(jnp.int32),
                           protein_ids.astype(jnp.int32) + ds_], axis=1)
    if weights is not None:
        if weights.ndim == 3:              # (B, Lp, 1) accepted like the module
            weights = weights[..., 0]
        w_prot = weights.astype(f32)
    else:
        w_prot = jnp.zeros((B, Lp), f32)
    wts = jnp.concatenate([jnp.zeros((B, Ld), f32), w_prot], axis=1)

    out = fused_embed_layernorm(
        ids.reshape(-1), wts.reshape(-1),
        fused_params["fused_table"], fused_params["pwe"],
        fused_params["ln_gamma"], fused_params["ln_beta"],
        h_real=h, eps=eps, out_dtype=out_dtype)
    # Strip lane padding (no-op when H is already a multiple of 128).
    return out[:, :h].reshape(B, Ld + Lp, h)


def _reference_forward(params, drug_comb_ids, protein_ids, weights, eps=1e-12):
    """Pure-JAX f32 reference mirroring the PyTorch forward."""
    drug_e = jnp.take(params["drug_table"], drug_comb_ids, axis=0)
    prot_e = jnp.take(params["protein_table"], protein_ids, axis=0)
    drug_p = drug_e @ params["drug_W"] + params["drug_b"]
    prot_p = prot_e @ params["protein_W"] + params["protein_b"]
    if weights is not None:
        w = weights[..., None]
        prot_p = prot_p + w * params["pwe"].reshape(1, 1, -1)
    emb = jnp.concatenate([drug_p, prot_p], axis=1)
    mean = jnp.mean(emb, axis=-1, keepdims=True)
    var = jnp.mean((emb - mean) ** 2, axis=-1, keepdims=True)
    emb = (emb - mean) * jax.lax.rsqrt(var + eps)
    return emb * params["ln_gamma"] + params["ln_beta"]


if __name__ == "__main__":
    # Small config consistent with the module: project_with_bias=True,
    # layer_norm_eps=1e-12, dropout in eval mode.
    drug_size, protein_size = 12, 20
    drug_hidden, protein_hidden, hidden = 16, 24, 32
    B, Ld, Lp = 2, 2, 8

    key = jax.random.PRNGKey(0)
    k = jax.random.split(key, 8)
    params = {
        # "reset_*_embeddings": frozen pretrained feature tables (synthetic).
        "drug_table": jax.random.normal(k[0], (drug_size, drug_hidden), jnp.float32),
        "protein_table": jax.random.normal(k[1], (protein_size, protein_hidden), jnp.float32),
        "drug_W": jax.random.normal(k[2], (drug_hidden, hidden), jnp.float32) * 0.1,
        "drug_b": jax.random.normal(k[3], (hidden,), jnp.float32) * 0.1,
        "protein_W": jax.random.normal(k[4], (protein_hidden, hidden), jnp.float32) * 0.1,
        "protein_b": jax.random.normal(k[5], (hidden,), jnp.float32) * 0.1,
        "pwe": jnp.ones((1, hidden), jnp.float32),          # nn.Parameter(torch.ones)
        "ln_gamma": jnp.ones((hidden,), jnp.float32),
        "ln_beta": jnp.zeros((hidden,), jnp.float32),
    }

    drug_comb_ids = jax.random.randint(k[6], (B, Ld), 0, drug_size, jnp.int32)
    protein_ids = jax.random.randint(k[7], (B, Lp), 0, protein_size, jnp.int32)
    weights = jax.random.uniform(jax.random.PRNGKey(1), (B, Lp), jnp.float32)

    # One-time param prep (hoisted out of the per-call path).
    fused_params = build_fused_params(params)

    # Tolerance covers the single bf16 rounding of the fused lookup table
    # (matmul accumulation and LayerNorm are f32).
    atol, rtol = 5e-2, 5e-2

    out = drug_protein_embedding_forward(fused_params, drug_comb_ids,
                                         protein_ids, weights)
    out = jax.block_until_ready(out)
    ref = _reference_forward(params, drug_comb_ids, protein_ids, weights)
    assert out.shape == (B, Ld + Lp, hidden)
    assert jnp.allclose(out, ref, atol=atol, rtol=rtol), "mismatch vs reference (weights)"

    out_nw = drug_protein_embedding_forward(fused_params, drug_comb_ids,
                                            protein_ids, None)
    out_nw = jax.block_until_ready(out_nw)
    ref_nw = _reference_forward(params, drug_comb_ids, protein_ids, None)
    assert jnp.allclose(out_nw, ref_nw, atol=atol, rtol=rtol), "mismatch vs reference (no weights)"

    # Optional bf16 output path (halves HBM writeback when downstream accepts it).
    out_bf16 = drug_protein_embedding_forward(fused_params, drug_comb_ids,
                                              protein_ids, weights,
                                              out_dtype=jnp.bfloat16)
    out_bf16 = jax.block_until_ready(out_bf16)
    assert out_bf16.shape == (B, Ld + Lp, hidden)
    assert jnp.allclose(out_bf16.astype(jnp.float32), ref, atol=atol, rtol=rtol), \
        "mismatch vs reference (bf16 output)"

    print("KERNEL_OK")
</pallas_src>

<mosaic_0001>
module attributes {stable_mosaic.version = 11 : i64} {
  func.func @_fused_embed_kernel(%arg0: i32, %arg1: memref<16x1xi32, #tpu.memory_space<vmem>>, %arg2: memref<16x1xf32, #tpu.memory_space<vmem>>, %arg3: memref<32x128xbf16, #tpu.memory_space<vmem>>, %arg4: memref<1x128xf32, #tpu.memory_space<vmem>>, %arg5: memref<1x128xf32, #tpu.memory_space<vmem>>, %arg6: memref<1x128xf32, #tpu.memory_space<vmem>>, %arg7: memref<16x128xf32, #tpu.memory_space<vmem>>) attributes {dimension_semantics = [#tpu.dimension_semantics<parallel>], iteration_bounds = array<i64: 2>, scalar_prefetch = 0 : i64, scratch_operands = 0 : i64, tpu.core_type = #tpu.core_type<tc>, window_params = [{transform_indices = @transform_0, window_bounds = array<i64: 16, 1>}, {transform_indices = @transform_1, window_bounds = array<i64: 16, 1>}, {pipeline_mode = #tpu.pipeline_mode<synchronous>, transform_indices = @transform_2, window_bounds = array<i64: 32, 128>}, {pipeline_mode = #tpu.pipeline_mode<synchronous>, transform_indices = @transform_3, window_bounds = array<i64: 1, 128>}, {pipeline_mode = #tpu.pipeline_mode<synchronous>, transform_indices = @transform_4, window_bounds = array<i64: 1, 128>}, {pipeline_mode = #tpu.pipeline_mode<synchronous>, transform_indices = @transform_5, window_bounds = array<i64: 1, 128>}, {transform_indices = @transform_6, window_bounds = array<i64: 16, 128>}]} {
    %c0 = arith.constant 0 : index
    %c0_0 = arith.constant 0 : index
    %0 = vector.load %arg1[%c0, %c0_0] : memref<16x1xi32, #tpu.memory_space<vmem>>, vector<16x1xi32>
    %1 = tpu.iota {dimensions = array<i32: 1>} : vector<16x32xi32>
    %2 = vector.broadcast %0 : vector<16x1xi32> to vector<16x32xi32>
    %3 = arith.cmpi eq, %2, %1 : vector<16x32xi32>
    %4 = arith.extui %3 : vector<16x32xi1> to vector<16x32xi32>
    %5 = arith.sitofp %4 : vector<16x32xi32> to vector<16x32xf32>
    %6 = arith.truncf %5 : vector<16x32xf32> to vector<16x32xbf16>
    %c0_1 = arith.constant 0 : index
    %c0_2 = arith.constant 0 : index
    %7 = vector.load %arg3[%c0_1, %c0_2] : memref<32x128xbf16, #tpu.memory_space<vmem>>, vector<32x128xbf16>
    %cst = arith.constant dense<0.000000e+00> : vector<16x128xf32>
    %8 = tpu.matmul %6, %7, %cst {dimension_numbers = #tpu.dot_dimension_numbers<[1], [0], [0], [1], [0, 0, 1, 1], [], []>} : vector<16x32xbf16>, vector<32x128xbf16>, vector<16x128xf32> -> vector<16x128xf32>
    %c0_3 = arith.constant 0 : index
    %c0_4 = arith.constant 0 : index
    %9 = vector.load %arg2[%c0_3, %c0_4] : memref<16x1xf32, #tpu.memory_space<vmem>>, vector<16x1xf32>
    %c0_5 = arith.constant 0 : index
    %c0_6 = arith.constant 0 : index
    %10 = vector.load %arg4[%c0_5, %c0_6] : memref<1x128xf32, #tpu.memory_space<vmem>>, vector<1x128xf32>
    %11 = vector.broadcast %9 : vector<16x1xf32> to vector<16x128xf32>
    %12 = vector.broadcast %10 : vector<1x128xf32> to vector<16x128xf32>
    %13 = arith.mulf %11, %12 : vector<16x128xf32>
    %14 = arith.addf %8, %13 : vector<16x128xf32>
    %15 = tpu.iota {dimensions = array<i32: 1>} : vector<1x128xi32>
    %c32_i32 = arith.constant 32 : i32
    %16 = vector.broadcast %c32_i32 : i32 to vector<1x128xi32>
    %17 = arith.cmpi slt, %15, %16 : vector<1x128xi32>
    %18 = arith.extui %17 : vector<1x128xi1> to vector<1x128xi32>
    %19 = arith.sitofp %18 : vector<1x128xi32> to vector<1x128xf32>
    %cst_7 = arith.constant dense<0.000000e+00> : vector<16xf32>
    %20 = vector.multi_reduction <add>, %14, %cst_7 [1] : vector<16x128xf32> to vector<16xf32>
    %21 = vector.shape_cast %20 : vector<16xf32> to vector<16x1xf32>
    %cst_8 = arith.constant 3.125000e-02 : f32
    %22 = vector.broadcast %cst_8 : f32 to vector<16x1xf32>
    %23 = arith.mulf %21, %22 : vector<16x1xf32>
    %24 = vector.broadcast %23 : vector<16x1xf32> to vector<16x128xf32>
    %25 = vector.broadcast %19 : vector<1x128xf32> to vector<16x128xf32>
    %26 = arith.mulf %24, %25 : vector<16x128xf32>
    %27 = arith.subf %14, %26 : vector<16x128xf32>
    %28 = arith.mulf %27, %27 : vector<16x128xf32>
    %cst_9 = arith.constant dense<0.000000e+00> : vector<16xf32>
    %29 = vector.multi_reduction <add>, %28, %cst_9 [1] : vector<16x128xf32> to vector<16xf32>
    %30 = vector.shape_cast %29 : vector<16xf32> to vector<16x1xf32>
    %cst_10 = arith.constant 3.125000e-02 : f32
    %31 = vector.broadcast %cst_10 : f32 to vector<16x1xf32>
    %32 = arith.mulf %30, %31 : vector<16x1xf32>
    %cst_11 = arith.constant 9.99999996E-13 : f32
    %33 = vector.broadcast %cst_11 : f32 to vector<16x1xf32>
    %34 = arith.addf %32, %33 : vector<16x1xf32>
    %35 = math.rsqrt %34 : vector<16x1xf32>
    %36 = vector.broadcast %35 : vector<16x1xf32> to vector<16x128xf32>
    %37 = arith.mulf %27, %36 : vector<16x128xf32>
    %c0_12 = arith.constant 0 : index
    %c0_13 = arith.constant 0 : index
    %38 = vector.load %arg5[%c0_12, %c0_13] : memref<1x128xf32, #tpu.memory_space<vmem>>, vector<1x128xf32>
    %39 = vector.broadcast %38 : vector<1x128xf32> to vector<16x128xf32>
    %40 = arith.mulf %37, %39 : vector<16x128xf32>
    %c0_14 = arith.constant 0 : index
    %c0_15 = arith.constant 0 : index
    %41 = vector.load %arg6[%c0_14, %c0_15] : memref<1x128xf32, #tpu.memory_space<vmem>>, vector<1x128xf32>
    %42 = vector.broadcast %41 : vector<1x128xf32> to vector<16x128xf32>
    %43 = arith.addf %40, %42 : vector<16x128xf32>
    %c0_16 = arith.constant 0 : index
    %c0_17 = arith.constant 0 : index
    %44 = vector.load %arg7[%c0_16, %c0_17] : memref<16x128xf32, #tpu.memory_space<vmem>>, vector<16x128xf32>
    tpu.vector_store %arg7[%c0_16, %c0_17], %43 {strides = array<i32>} : memref<16x128xf32, #tpu.memory_space<vmem>>, vector<16x128xf32>,
    return
  }
  func.func @transform_0(%arg0: i32) -> (i32, i32) {
    %c0_i32 = arith.constant 0 : i32
    %c0_i32_0 = arith.constant 0 : i32
    return %arg0, %c0_i32 : i32, i32
  }
  func.func @transform_1(%arg0: i32) -> (i32, i32) {
    %c0_i32 = arith.constant 0 : i32
    %c0_i32_0 = arith.constant 0 : i32
    return %arg0, %c0_i32 : i32, i32
  }
  func.func @transform_2(%arg0: i32) -> (i32, i32) {
    %c0_i32 = arith.constant 0 : i32
    %c0_i32_0 = arith.constant 0 : i32
    %c0_i32_1 = arith.constant 0 : i32
    return %c0_i32, %c0_i32_0 : i32, i32
  }
  func.func @transform_3(%arg0: i32) -> (i32, i32) {
    %c0_i32 = arith.constant 0 : i32
    %c0_i32_0 = arith.constant 0 : i32
    %c0_i32_1 = arith.constant 0 : i32
    return %c0_i32, %c0_i32_0 : i32, i32
  }
  func.func @transform_4(%arg0: i32) -> (i32, i32) {
    %c0_i32 = arith.constant 0 : i32
    %c0_i32_0 = arith.constant 0 : i32
    %c0_i32_1 = arith.constant 0 : i32
    return %c0_i32, %c0_i32_0 : i32, i32
  }
  func.func @transform_5(%arg0: i32) -> (i32, i32) {
    %c0_i32 = arith.constant 0 : i32
    %c0_i32_0 = arith.constant 0 : i32
    %c0_i32_1 = arith.constant 0 : i32
    return %c0_i32, %c0_i32_0 : i32, i32
  }
  func.func @transform_6(%arg0: i32) -> (i32, i32) {
    %c0_i32 = arith.constant 0 : i32
    %c0_i32_0 = arith.constant 0 : i32
    return %arg0, %c0_i32 : i32, i32
  }
}

</mosaic_0001>

<llo_original>
// kernel: tpu_custom_call.1
$region0: #{tpu_custom_call.1}
  #allocation0 [shape = 'u32[]', space=smem, size = 0x4, offset = 0x4, fixed_abs, tag = 'smem constant byte address 0x4 - core index']
  #allocation1 [shape = 'u32[144,128]{1,0:T(1,128)}', space=vmem, size = 0x12000, scoped, tag = 'internal scratch']
  %s0 = inlined_call_operand.vmem [shape: s32[20,1], index: 0, kind: input, shape index: {}]
  %s1 = inlined_call_operand.vmem [shape: f32[20,1], index: 1, kind: input, shape index: {}]
  %s2 = inlined_call_operand.vmem [shape: bf16[32,128], index: 2, kind: input, shape index: {}]
  %s3 = inlined_call_operand.vmem [shape: f32[1,128], index: 3, kind: input, shape index: {}]
  %s4 = inlined_call_operand.vmem [shape: f32[1,128], index: 4, kind: input, shape index: {}]
  %s5 = inlined_call_operand.vmem [shape: f32[1,128], index: 5, kind: input, shape index: {}]
  %s6 = inlined_call_operand.hbm [shape: f32[20,128], index: 6, kind: output, shape index: {}]
  %s7 = sld [smem:[#allocation0]]
  $region57: #{tpu_custom_call.1} parent=0
    _
  %s9 = ssub.s32 1, %s7
  %s10 = scalar_select 0, %s9, %s7
  $region1: #{tpu_custom_call.1} parent=0
    #allocation2 [shape = 'u8[16384]{0}', space=vmem, size = 0x4000, scoped, tag = 'output window, operand 0']
    #allocation3 [shape = 's32[2]{0}', space=sflag, size = 0x8, scoped, tag = 'scoped memory for tpu_custom_call.1']
    %11 = vsyncpa [#allocation3], 0
    %s12 = scalar_lea.sflag [#allocation3], 1
    %13 = vsyncpa %s12, 0
    loop: start=0, step=1, limit=4
    $region2: #{tpu_custom_call.1} parent=1 // loop_pre_header
      _
    $region3: #{tpu_custom_call.1} parent=1 // loop_header
      %s15 = sphi 0, %s19
      %p16 = scmp.ge.s32.totalorder %s15, 4
      %s25 = sphi 0, %s27
      %s28 = sphi 0, %s25
      %s29 = sphi 0, %s28
      %s45 = sphi 0, %s29
      %s51 = sphi 0, %s53
      %s54 = sphi 0, %s51
      %s55 = sphi 0, %s54
      %s71 = sphi 0, %s55
      %s75 = sphi 0, %s75
      %s77 = sphi 0, %s75
      %s78 = sphi 0, %s77
      %s92 = sphi 0, %s78
      %s96 = sphi 0, %s96
      %s98 = sphi 0, %s96
      %s99 = sphi 0, %s98
      %s113 = sphi 0, %s99
      %s117 = sphi 0, %s117
      %s119 = sphi 0, %s117
      %s120 = sphi 0, %s119
      %s134 = sphi 0, %s120
      %s138 = sphi 0, %s138
      %s140 = sphi 0, %s138
      %s141 = sphi 0, %s140
      %s155 = sphi 0, %s141
      %s161 = sphi 0, %s163
      %s164 = sphi 0, %s161
      %s165 = sphi 0, %s164
      %s181 = sphi 0, %s165
    $region4: #{tpu_custom_call.1} parent=1 // loop_header_branch
      %18 = sbr.rel (%p16) target = $region8
    $region5: #{tpu_custom_call.1} parent=1 // loop_body
      %s20 = ssub.s32 %s15, 1
      %s21 = ssub.s32 %s15, 2
      %s22 = sadd.s32 %s15, 1
      %s23 = ssub.s32 %s15, %s22
      %p24 = scmp.eq.s32.totalorder %s23, 0
      %s26 = sadd.s32 %s25, 1
      %s27 = scalar_select %p24, %s25, %s26
      %p30 = pneg %p24
      %p31 = scmp.eq.s32.totalorder %s15, 1
      %p32 = por %p30, %p31
      %p33 = scmp.ne.s32.totalorder %s25, %s28
      %p34 = scmp.eq.s32.totalorder %s15, 0
      %p35 = por %p33, %p34
      %p36 = scmp.ne.s32.totalorder %s25, %s28
      %p37 = scmp.eq.s32.totalorder %s20, 1
      %p38 = por %p36, %p37
      %p39 = scmp.ne.s32.totalorder %s28, %s29
      %p40 = scmp.eq.s32.totalorder %s20, 0
      %p41 = por %p39, %p40
      %p42 = scmp.ne.s32.totalorder %s28, %s29
      %p43 = scmp.eq.s32.totalorder %s21, 1
      %p44 = por %p42, %p43
      %p46 = scmp.ne.s32.totalorder %s29, %s45
      %p47 = scmp.eq.s32.totalorder %s21, 0
      %p48 = por %p46, %p47
      %s49 = ssub.s32 %s15, %s22
      %p50 = scmp.eq.s32.totalorder %s49, 0
      %s52 = sadd.s32 %s51, 1
      %s53 = scalar_select %p50, %s51, %s52
      %p56 = pneg %p50
      %p57 = scmp.eq.s32.totalorder %s15, 1
      %p58 = por %p56, %p57
      %p59 = scmp.ne.s32.totalorder %s51, %s54
      %p60 = scmp.eq.s32.totalorder %s15, 0
      %p61 = por %p59, %p60
      %p62 = scmp.ne.s32.totalorder %s51, %s54
      %p63 = scmp.eq.s32.totalorder %s20, 1
      %p64 = por %p62, %p63
      %p65 = scmp.ne.s32.totalorder %s54, %s55
      %p66 = scmp.eq.s32.totalorder %s20, 0
      %p67 = por %p65, %p66
      %p68 = scmp.ne.s32.totalorder %s54, %s55
      %p69 = scmp.eq.s32.totalorder %s21, 1
      %p70 = por %p68, %p69
      %p72 = scmp.ne.s32.totalorder %s55, %s71
      %p73 = scmp.eq.s32.totalorder %s21, 0
      %p74 = por %p72, %p73
      %s76 = sadd.s32 %s75, 1
      %p79 = scmp.eq.s32.totalorder %s15, 1
      %p80 = scmp.ne.s32.totalorder %s75, %s77
      %p81 = scmp.eq.s32.totalorder %s15, 0
      %p82 = por %p80, %p81
      %p83 = scmp.ne.s32.totalorder %s75, %s77
      %p84 = scmp.eq.s32.totalorder %s20, 1
      %p85 = por %p83, %p84
      %p86 = scmp.ne.s32.totalorder %s77, %s78
      %p87 = scmp.eq.s32.totalorder %s20, 0
      %p88 = por %p86, %p87
      %p89 = scmp.ne.s32.totalorder %s77, %s78
      %p90 = scmp.eq.s32.totalorder %s21, 1
      %p91 = por %p89, %p90
      %p93 = scmp.ne.s32.totalorder %s78, %s92
      %p94 = scmp.eq.s32.totalorder %s21, 0
      %p95 = por %p93, %p94
      %s97 = sadd.s32 %s96, 1
      %p100 = scmp.eq.s32.totalorder %s15, 1
      %p101 = scmp.ne.s32.totalorder %s96, %s98
      %p102 = scmp.eq.s32.totalorder %s15, 0
      %p103 = por %p101, %p102
      %p104 = scmp.ne.s32.totalorder %s96, %s98
      %p105 = scmp.eq.s32.totalorder %s20, 1
      %p106 = por %p104, %p105
      %p107 = scmp.ne.s32.totalorder %s98, %s99
      %p108 = scmp.eq.s32.totalorder %s20, 0
      %p109 = por %p107, %p108
      %p110 = scmp.ne.s32.totalorder %s98, %s99
      %p111 = scmp.eq.s32.totalorder %s21, 1
      %p112 = por %p110, %p111
      %p114 = scmp.ne.s32.totalorder %s99, %s113
      %p115 = scmp.eq.s32.totalorder %s21, 0
      %p116 = por %p114, %p115
      %s118 = sadd.s32 %s117, 1
      %p121 = scmp.eq.s32.totalorder %s15, 1
      %p122 = scmp.ne.s32.totalorder %s117, %s119
      %p123 = scmp.eq.s32.totalorder %s15, 0
      %p124 = por %p122, %p123
      %p125 = scmp.ne.s32.totalorder %s117, %s119
      %p126 = scmp.eq.s32.totalorder %s20, 1
      %p127 = por %p125, %p126
      %p128 = scmp.ne.s32.totalorder %s119, %s120
      %p129 = scmp.eq.s32.totalorder %s20, 0
      %p130 = por %p128, %p129
      %p131 = scmp.ne.s32.totalorder %s119, %s120
      %p132 = scmp.eq.s32.totalorder %s21, 1
      %p133 = por %p131, %p132
      %p135 = scmp.ne.s32.totalorder %s120, %s134
      %p136 = scmp.eq.s32.totalorder %s21, 0
      %p137 = por %p135, %p136
      %s139 = sadd.s32 %s138, 1
      %p142 = scmp.eq.s32.totalorder %s15, 1
      %p143 = scmp.ne.s32.totalorder %s138, %s140
      %p144 = scmp.eq.s32.totalorder %s15, 0
      %p145 = por %p143, %p144
      %p146 = scmp.ne.s32.totalorder %s138, %s140
      %p147 = scmp.eq.s32.totalorder %s20, 1
      %p148 = por %p146, %p147
      %p149 = scmp.ne.s32.totalorder %s140, %s141
      %p150 = scmp.eq.s32.totalorder %s20, 0
      %p151 = por %p149, %p150
      %p152 = scmp.ne.s32.totalorder %s140, %s141
      %p153 = scmp.eq.s32.totalorder %s21, 1
      %p154 = por %p152, %p153
      %p156 = scmp.ne.s32.totalorder %s141, %s155
      %p157 = scmp.eq.s32.totalorder %s21, 0
      %p158 = por %p156, %p157
      %s159 = ssub.s32 %s15, %s22
      %p160 = scmp.eq.s32.totalorder %s159, 0
      %s162 = sadd.s32 %s161, 1
      %s163 = scalar_select %p160, %s161, %s162
      %p166 = pneg %p160
      %p167 = scmp.eq.s32.totalorder %s15, 1
      %p168 = por %p166, %p167
      %p169 = scmp.ne.s32.totalorder %s161, %s164
      %p170 = scmp.eq.s32.totalorder %s15, 0
      %p171 = por %p169, %p170
      %p172 = scmp.ne.s32.totalorder %s161, %s164
      %p173 = scmp.eq.s32.totalorder %s20, 1
      %p174 = por %p172, %p173
      %p175 = scmp.ne.s32.totalorder %s164, %s165
      %p176 = scmp.eq.s32.totalorder %s20, 0
      %p177 = por %p175, %p176
      %p178 = scmp.ne.s32.totalorder %s164, %s165
      %p179 = scmp.eq.s32.totalorder %s21, 1
      %p180 = por %p178, %p179
      %p182 = scmp.ne.s32.totalorder %s165, %s181
      %p183 = scmp.eq.s32.totalorder %s21, 0
      %p184 = por %p182, %p183
      %p185 = scmp.le.s32.totalorder 1, %s15
      %p186 = scmp.lt.s32.totalorder %s15, 3
      %p187 = pnand %p185, %p186
      %p188 = pneg %p187
      // Predicated region
      $region9: #{tpu_custom_call.1} parent=5 // pred_check
        _
      $region10: #{tpu_custom_call.1} parent=5 // pred_check_branch
        %190 = sbr.rel (%p187) target = $region12
      $region11: #{tpu_custom_call.1} parent=5 // pred_region
        %s191 = ssub.s32 %s15, 1
        // Predicated region
        $region13: #{tpu_custom_call.1} parent=11 // pred_check
          %p192 = pneg %p88
        $region14: #{tpu_custom_call.1} parent=11 // pred_check_branch
          %194 = sbr.rel (%p192) target = $region16
        $region15: #{tpu_custom_call.1} parent=11 // pred_region
          _
        $region16: #{tpu_custom_call.1} parent=11 // pred_fallthru
          _
        // Predicated region
        $region17: #{tpu_custom_call.1} parent=11 // pred_check
          %p195 = pneg %p109
        $region18: #{tpu_custom_call.1} parent=11 // pred_check_branch
          %197 = sbr.rel (%p195) target = $region20
        $region19: #{tpu_custom_call.1} parent=11 // pred_region
          _
        $region20: #{tpu_custom_call.1} parent=11 // pred_fallthru
          _
        // Predicated region
        $region21: #{tpu_custom_call.1} parent=11 // pred_check
          %p198 = pneg %p130
        $region22: #{tpu_custom_call.1} parent=11 // pred_check_branch
          %200 = sbr.rel (%p198) target = $region24
        $region23: #{tpu_custom_call.1} parent=11 // pred_region
          _
        $region24: #{tpu_custom_call.1} parent=11 // pred_fallthru
          _
        // Predicated region
        $region25: #{tpu_custom_call.1} parent=11 // pred_check
          %p201 = pneg %p151
        $region26: #{tpu_custom_call.1} parent=11 // pred_check_branch
          %203 = sbr.rel (%p201) target = $region28
        $region27: #{tpu_custom_call.1} parent=11 // pred_region
          _
        $region28: #{tpu_custom_call.1} parent=11 // pred_fallthru
          _
      $region12: #{tpu_custom_call.1} parent=5 // pred_fallthru
        _
      %p204 = scmp.lt.s32.totalorder %s15, 2
      // Predicated region
      $region29: #{tpu_custom_call.1} parent=5 // pred_check
        %p205 = pneg %p204
      $region30: #{tpu_custom_call.1} parent=5 // pred_check_branch
        %207 = sbr.rel (%p205) target = $region32
      $region31: #{tpu_custom_call.1} parent=5 // pred_region
        // Predicated region
        $region33: #{tpu_custom_call.1} parent=31 // pred_check
          %p208 = pneg %p35
        $region34: #{tpu_custom_call.1} parent=31 // pred_check_branch
          %210 = sbr.rel (%p208) target = $region36
        $region35: #{tpu_custom_call.1} parent=31 // pred_region
          %s211 = smul.u32 2, %s15
          %s212 = ssub.s32 3, %s211
          %p213 = scmp.lt.s32.totalorder %s212, 2
          %s214 = scalar_select %p213, %s212, 2
          %s215 = smul.u32 128, %s214
          %p216 = scmp.lt.s32.totalorder %s211, 2
          %s217 = scalar_select %p216, %s211, 2
          %s218 = smul.addr %s217, 8
          %s219 = scalar_lea.vmem %s0, %s218
          %s220 = smul.u32 2, %s15
          %s221 = ssub.s32 3, %s220
          %p222 = scmp.lt.s32.totalorder %s221, 2
          %s223 = scalar_select %p222, %s221, 2
          %s224 = smul.u32 128, %s223
        $region36: #{tpu_custom_call.1} parent=31 // pred_fallthru
          _
        // Predicated region
        $region37: #{tpu_custom_call.1} parent=31 // pred_check
          %p225 = pneg %p61
        $region38: #{tpu_custom_call.1} parent=31 // pred_check_branch
          %227 = sbr.rel (%p225) target = $region40
        $region39: #{tpu_custom_call.1} parent=31 // pred_region
          %s228 = smul.u32 2, %s15
          %s229 = ssub.s32 3, %s228
          %p230 = scmp.lt.s32.totalorder %s229, 2
          %s231 = scalar_select %p230, %s229, 2
          %s232 = smul.u32 128, %s231
          %p233 = scmp.lt.s32.totalorder %s228, 2
          %s234 = scalar_select %p233, %s228, 2
          %s235 = smul.addr %s234, 8
          %s236 = scalar_lea.vmem %s1, %s235
          %s237 = smul.u32 2, %s15
          %s238 = ssub.s32 3, %s237
          %p239 = scmp.lt.s32.totalorder %s238, 2
          %s240 = scalar_select %p239, %s238, 2
          %s241 = smul.u32 128, %s240
        $region40: #{tpu_custom_call.1} parent=31 // pred_fallthru
          _
      $region32: #{tpu_custom_call.1} parent=5 // pred_fallthru
        _
      %p242 = scmp.le.s32.totalorder 1, %s15
      %p243 = scmp.lt.s32.totalorder %s15, 3
      %p244 = pnand %p242, %p243
      %p245 = pneg %p244
      // Predicated region
      $region41: #{tpu_custom_call.1} parent=5 // pred_check
        _
      $region42: #{tpu_custom_call.1} parent=5 // pred_check_branch
        %247 = sbr.rel (%p244) target = $region44
      $region43: #{tpu_custom_call.1} parent=5 // pred_region
        %s248 = ssub.s32 %s15, 1
        %s249 = smul.u32 2, %s20
        %s250 = ssub.s32 3, %s249
        %p251 = scmp.lt.s32.totalorder %s250, 2
        %s252 = scalar_select %p251, %s250, 2
        %s253 = smul.u32 128, %s252
        %p254 = scmp.lt.s32.totalorder %s249, 2
        %s255 = scalar_select %p254, %s249, 2
        %s256 = smul.addr %s255, 8
        %s257 = scalar_lea.vmem %s0, %s256
        %p258 = pneg %p41
        %p259 = pneg %p38
        %s260 = smul.u32 2, %s20
        %s261 = ssub.s32 3, %s260
        %p262 = scmp.lt.s32.totalorder %s261, 2
        %s263 = scalar_select %p262, %s261, 2
        %s264 = smul.u32 128, %s263
        %p265 = scmp.lt.s32.totalorder %s260, 2
        %s266 = scalar_select %p265, %s260, 2
        %s267 = smul.addr %s266, 8
        %s268 = scalar_lea.vmem %s1, %s267
        %p269 = pneg %p67
        %p270 = pneg %p64
        %p271 = pneg %p88
        %p272 = pneg %p85
        %p273 = pneg %p109
        %p274 = pneg %p106
        %p275 = pneg %p130
        %p276 = pneg %p127
        %p277 = pneg %p151
        %p278 = pneg %p148
        %p279 = pneg %p177
        %p280 = pneg %p174
        %s281 = sand.u32 %s164, 1
        %s282 = scalar_lea.sflag [#allocation3], %s281
        %s283 = sand.u32 %s164, 1
        %s284 = smul.addr %s283, 16
        %s285 = scalar_lea.vmem [#allocation2], %s284
        %s286 = smul.u32 2, %s20
        %s287 = ssub.s32 3, %s286
        %p288 = scmp.lt.s32.totalorder %s287, 2
        %s289 = scalar_select %p288, %s287, 2
        %s290 = smul.u32 128, %s289
        %p291 = scmp.lt.s32.totalorder %s286, 2
        %s292 = scalar_select %p291, %s286, 2
        %s293 = smul.addr %s292, 8
        %s294 = scalar_lea.vmem %s0, %s293
        %s295 = smul.u32 2, %s20
        %s296 = ssub.s32 3, %s295
        %p297 = scmp.lt.s32.totalorder %s296, 2
        %s298 = scalar_select %p297, %s296, 2
        %s299 = smul.u32 128, %s298
        %s300 = smul.u32 2, %s20
        %s301 = ssub.s32 3, %s300
        %p302 = scmp.lt.s32.totalorder %s301, 2
        %s303 = scalar_select %p302, %s301, 2
        %s304 = smul.u32 128, %s303
        %p305 = scmp.lt.s32.totalorder %s300, 2
        %s306 = scalar_select %p305, %s300, 2
        %s307 = smul.addr %s306, 8
        %s308 = scalar_lea.vmem %s1, %s307
        %s309 = smul.u32 2, %s20
        %s310 = ssub.s32 3, %s309
        %p311 = scmp.lt.s32.totalorder %s310, 2
        %s312 = scalar_select %p311, %s310, 2
        %s313 = smul.u32 128, %s312
        %s314 = smul.u32 2, %s20
        %s315 = ssub.s32 3, %s314
        %p316 = scmp.lt.s32.totalorder %s315, 2
        %s317 = scalar_select %p316, %s315, 2
        %s318 = smul.u32 128, %s317
        %v320 = vld [vmem:[%s294] sm:$0xff]
        %v321 = vld [vmem:[%s294 + $0x8] sm:$0xff]
        %v322 = vlaneseq
        %v323 = vand.u32 %v322, 127
        %324 = vset.pattern.permute.xlu0 0
        %325 = vperm.xlu0 %324, %v320
        %v326 = vpop.permute.xlu0 %325
        %327 = vset.pattern.permute.xlu0 0
        %328 = vperm.xlu0 %327, %v321
        %v329 = vpop.permute.xlu0 %328
        %vm330 = vcmp.eq.s32.totalorder %v326, %v323
        %vm331 = vcmp.eq.s32.totalorder %v329, %v323
        %v332 = vsel %vm330, 1, 0
        %v333 = vsel %vm331, 1, 0
        %v334 = vcvt.s32.f32 %v332
        %v335 = vcvt.s32.f32 %v333
        %v336 = vpack.c.bf16 %v335, %v334
        %v337 = vld [vmem:[%s2] sm:$0xf]
        %v338 = vld [vmem:[%s2 + $0x4] sm:$0xf]
        %v339 = vld [vmem:[%s2 + $0x8] sm:$0xf]
        %v340 = vld [vmem:[%s2 + $0xc] sm:$0xf]
        %v341 = vld [vmem:[%s308] sm:$0xff]
        %v342 = vld [vmem:[%s308 + $0x8] sm:$0xff]
        %v343 = vld [vmem:[%s3] sm:$0x1]
        %345 = vset.pattern.permute.xlu0 0
        %346 = vperm.xlu0 %345, %v341
        %v347 = vpop.permute.xlu0 %346
        %350 = vset.pattern.permute.xlu0 0
        %351 = vperm.xlu0 %350, %v342
        %v352 = vpop.permute.xlu0 %351
        %v355 = vlaneseq
        %v356 = vshrl.u32 %v355, 7
        %v357 = vsub.s32 0, %v356
        %v358 = vrot.slane %v343, %v357
        %v360 = vmul.f32 %v347, %v358
        %v361 = vmul.f32 %v352, %v358
        %v366 = vunpack.c.l.b16 %v337
        %v367 = vunpack.c.l.b16 %v338
        %v368 = vunpack.c.l.b16 %v339
        %v369 = vunpack.c.l.b16 %v340
        %v370 = vpack.c.b16 %v367, %v366
        %v371 = vpack.c.b16 %v369, %v368
        %vm374 = vcmask 261120
        %v376 = vsel %vm374, %v336, 0
        %378 = vmatprep.subr.bf16.mxu0 0
        %379 = vmatpush1.bf16.msra.mxu0 %v370
        %380 = vmatprep.subr.bf16.mxu0 0
        %381 = vmatpush1.bf16.msra.mxu0 %v371
        %382 = vmatprep.subr.bf16.mxu0 0
        %383 = vmatpush1.bf16.msra.mxu0 0
        %384 = vmatprep.subr.bf16.mxu0 0
        %385 = vmatpush1.bf16.msra.mxu0 0
        %386 = vmatprep.subr.bf16.mxu0 0
        %387 = vmatpush1.bf16.msra.mxu0 0
        %388 = vmatprep.subr.bf16.mxu0 0
        %389 = vmatpush1.bf16.msra.mxu0 0
        %390 = vmatprep.subr.bf16.mxu0 0
        %391 = vmatpush1.bf16.msra.mxu0 0
        %392 = vmatprep.subr.bf16.mxu0 0
        %393 = vmatpush1.bf16.msra.mxu0 0
        %394 = vmatprep.subr.bf16.mxu0 0
        %395 = vmatpush1.bf16.msra.mxu0 0
        %396 = vmatprep.subr.bf16.mxu0 0
        %397 = vmatpush1.bf16.msra.mxu0 0
        %398 = vmatprep.subr.bf16.mxu0 0
        %399 = vmatpush1.bf16.msra.mxu0 0
        %400 = vmatprep.subr.bf16.mxu0 0
        %401 = vmatpush1.bf16.msra.mxu0 0
        %402 = vmatprep.subr.bf16.mxu0 0
        %403 = vmatpush1.bf16.msra.mxu0 0
        %404 = vmatprep.subr.bf16.mxu0 0
        %405 = vmatpush1.bf16.msra.mxu0 0
        %406 = vmatprep.subr.bf16.mxu0 0
        %407 = vmatpush1.bf16.msra.mxu0 0
        %408 = vmatprep.subr.bf16.mxu0 0
        %409 = vmatpush1.bf16.msra.mxu0 0
        %410 = vmatprep.mubr.bf16.mxu0 0
        %411 = vmatmul.mubr.bf16.gmra.mrb[0].mxu0 %v376
        %v412 = vpop.f32.mrb[0].mxu0
        %v413 = vadd.f32 %v360, %v412
        %v414 = vpop.f32.mrb[0].mxu0
        %v415 = vpop.f32.mrb[0].mxu0
        %v416 = vadd.f32 %v361, %v415
        %v417 = vpop.f32.mrb[0].mxu0
        %418 = vdwg.mxu0
        %vm419 = vcmp.lt.s32.totalorder %v323, 32
        %v420 = vsel %vm419, 1, 0
        %v421 = vcvt.s32.f32 %v420
        %422 = vadd.xlane.f32.xlu0 %v413
        %v423 = vpop.xlane.xlu0 %422
        %424 = vadd.xlane.f32.xlu0 %v416
        %v425 = vpop.xlane.xlu0 %424
        %v426 = vmul.f32 %v423, 0.03125
        %v427 = vmul.f32 %v425, 0.03125
        %v428 = vmul.f32 %v426, %v421
        %v429 = vmul.f32 %v427, %v421
        %v430 = vsub.f32 %v413, %v428
        %v431 = vsub.f32 %v416, %v429
        %v432 = vmul.f32 %v430, %v430
        %v433 = vmul.f32 %v431, %v431
        %434 = vadd.xlane.f32.xlu0 %v432
        %v435 = vpop.xlane.xlu0 %434
        %436 = vadd.xlane.f32.xlu0 %v433
        %v437 = vpop.xlane.xlu0 %436
        %v438 = vmul.f32 %v435, 0.03125
        %v439 = vmul.f32 %v437, 0.03125
        %v440 = vadd.f32 %v438, 1e-12
        %v441 = vadd.f32 %v439, 1e-12
        %v442 = vrsqrt.pop %v440
        %v443 = vrsqrt.pop %v441
        %v444 = vmul.f32 %v430, %v442
        %v445 = vmul.f32 %v431, %v443
        %v446 = vld [vmem:[%s4] sm:$0x1]
        %v448 = vlaneseq
        %v449 = vshrl.u32 %v448, 7
        %v450 = vsub.s32 0, %v449
        %v451 = vrot.slane %v446, %v450
        %v453 = vmul.f32 %v444, %v451
        %v454 = vmul.f32 %v445, %v451
        %v455 = vld [vmem:[%s5] sm:$0x1]
        %v457 = vlaneseq
        %v458 = vshrl.u32 %v457, 7
        %v459 = vsub.s32 0, %v458
        %v460 = vrot.slane %v455, %v459
        %v462 = vadd.f32 %v453, %v460
        %v463 = vadd.f32 %v454, %v460
        %464 = vst [vmem:[%s285] sm:$0xff] %v462
        %465 = vst [vmem:[%s285 + $0x8] sm:$0xff] %v463
        %s466 = sand.u32 %s164, 1
        %s467 = scalar_lea.sflag [#allocation3], %s466
        %s468 = sand.u32 %s164, 1
        %s469 = smul.addr %s468, 16
        %s470 = scalar_lea.vmem [#allocation2], %s469
        // Predicated region
        $region45: #{tpu_custom_call.1} parent=43 // pred_check
          %p471 = pneg %p174
        $region46: #{tpu_custom_call.1} parent=43 // pred_check_branch
          %473 = sbr.rel (%p471) target = $region48
        $region47: #{tpu_custom_call.1} parent=43 // pred_region
          %s474 = smul.u32 2, %s20
          %s475 = ssub.s32 3, %s474
          %p476 = scmp.lt.s32.totalorder %s475, 2
          %s477 = scalar_select %p476, %s475, 2
          %s478 = smul.u32 128, %s477
          %s480 = ssub.s32 256, %s478
          %481 = vsyncadd %s467, %s480
          %p482 = scmp.ne.s32.totalorder 0, %s478
          %s483 = smul.addr %s474, 128
          %s484 = scalar_lea.hbm %s6, %s483
          %s485 = smul.u32 8, %s477
          %s486 = sshll.u32 %s470, 4
          %s487 = int_to_ptr.vmem [resolvable:$true] %s486
          %s488 = sshll.u32 %s485, 4
          %492 = dma.vmem_to_hbm [thread:$0]  (%p482), %s487, %s488, %s484, %s467, 128, 128, 8
        $region48: #{tpu_custom_call.1} parent=43 // pred_fallthru
          _
      $region44: #{tpu_custom_call.1} parent=5 // pred_fallthru
        _
      %p493 = scmp.le.s32.totalorder 2, %s15
      // Predicated region
      $region49: #{tpu_custom_call.1} parent=5 // pred_check
        %p494 = pneg %p493
      $region50: #{tpu_custom_call.1} parent=5 // pred_check_branch
        %496 = sbr.rel (%p494) target = $region52
      $region51: #{tpu_custom_call.1} parent=5 // pred_region
        %s497 = ssub.s32 %s15, 2
        // Predicated region
        $region53: #{tpu_custom_call.1} parent=51 // pred_check
          %p498 = pneg %p180
        $region54: #{tpu_custom_call.1} parent=51 // pred_check_branch
          %500 = sbr.rel (%p498) target = $region56
        $region55: #{tpu_custom_call.1} parent=51 // pred_region
          %s501 = sand.u32 %s165, 1
          %s502 = scalar_lea.sflag [#allocation3], %s501
          %s503 = sand.u32 %s165, 1
          %s504 = smul.addr %s503, 16
          %s505 = scalar_lea.vmem [#allocation2], %s504
          %506 = dma.done %s502, 256
        $region56: #{tpu_custom_call.1} parent=51 // pred_fallthru
          _
      $region52: #{tpu_custom_call.1} parent=5 // pred_fallthru
        _
    $region6: #{tpu_custom_call.1} parent=1 // loop_footer
      %s19 = sadd.s32 1, %s15
    $region7: #{tpu_custom_call.1} parent=1 // loop_footer_branch
      %14 = sbr.rel target = $region3
    $region8: #{tpu_custom_call.1} parent=1 // loop_exit
      _
    %507 = vsyncpa [#allocation3], 1
    %s508 = scalar_lea.sflag [#allocation3], 1
    %509 = vsyncpa %s508, 1

</llo_original>
